<compile_context>
chip_gen: v6e
topology: v6e:2x2x1
jax: 0.10.0
libtpu: 0.0.40
codegen_flags: <defaults>
</compile_context>

<pallas_src>
import math

import jax
import jax.numpy as jnp
from jax import lax
from jax.experimental import pallas as pl
from jax.experimental.pallas import tpu as pltpu

NEG_INF = -1e30  # finite mask fill: never exp(NaN) even if a row of a tile is fully masked


# ----------------------------------------------------------------------------------------
# Lane-dense tiled linear kernel:  (B, T, Cin) @ (Cin, Cout) + (Cout,)
# ----------------------------------------------------------------------------------------
def _linear_kernel(x_ref, w_ref, b_ref, o_ref):
    x = x_ref[0].astype(w_ref.dtype)                                    # (tt, Cin) bf16
    acc = jnp.dot(x, w_ref[...], preferred_element_type=jnp.float32)    # (tt, Cout) f32
    o_ref[0] = (acc + b_ref[...]).astype(o_ref.dtype)


def linear_pallas(x, w, b, *, out_dtype=None, tile=256, matmul_dtype=jnp.bfloat16):
    """x: (B, T, Cin) ; w: (Cin, Cout) ; b: (Cout,) -> (B, T, Cout)."""
    B, T, Cin = x.shape
    Cout = w.shape[1]
    out_dtype = x.dtype if out_dtype is None else out_dtype
    tt = min(T, tile)
    assert T % tt == 0 and (tt == T or tt % 8 == 0)
    # TODO(synk): weight/bias blocks are grid-invariant; pl.Buffered(1) would halve their VMEM
    # footprint at very large C but is left at the default buffering for lowering safety.
    return pl.pallas_call(
        _linear_kernel,
        out_shape=jax.ShapeDtypeStruct((B, T, Cout), out_dtype),
        grid_spec=pltpu.PrefetchScalarGridSpec(
            num_scalar_prefetch=0,
            grid=(B, T // tt),
            in_specs=[
                pl.BlockSpec((1, tt, Cin), lambda b, i: (b, i, 0)),
                pl.BlockSpec((Cin, Cout), lambda b, i: (0, 0)),
                pl.BlockSpec((1, Cout), lambda b, i: (0, 0)),
            ],
            out_specs=pl.BlockSpec((1, tt, Cout), lambda b, i: (b, i, 0)),
        ),
        compiler_params=pltpu.CompilerParams(
            dimension_semantics=("parallel", "parallel")),
    )(x, w.astype(matmul_dtype), b.reshape(1, Cout).astype(jnp.float32))


# ----------------------------------------------------------------------------------------
# Flash-attention kernel over pre-projected Q/K/V (all heads batched per step)
# ----------------------------------------------------------------------------------------
def _make_flash_kernel(tq, tk, n_kv_tiles):
    def kernel(q_ref, k_ref, v_ref, o_ref, m_sc, l_sc, acc_sc):
        qi = pl.program_id(1)
        ki = pl.program_id(2)

        @pl.when(ki == 0)
        def _init():
            m_sc[...] = jnp.full_like(m_sc, NEG_INF)
            l_sc[...] = jnp.zeros_like(l_sc)
            acc_sc[...] = jnp.zeros_like(acc_sc)

        def step(apply_mask):
            # All heads at once: (H, tq, D) x (H, tk, D) -> (H, tq, tk), f32 accumulation.
            s = jnp.einsum('hqd,hkd->hqk', q_ref[0], k_ref[0],
                           preferred_element_type=jnp.float32)
            if apply_mask:  # only on tiles straddling the diagonal
                row = qi * tq + lax.broadcasted_iota(jnp.int32, (tq, tk), 0)
                col = ki * tk + lax.broadcasted_iota(jnp.int32, (tq, tk), 1)
                s = jnp.where((col <= row)[None, :, :], s, NEG_INF)
            # Online softmax.  Safety invariant: the ki=0 tile always contains column 0
            # (<= every row), so m is finite before any fully-masked row can appear and
            # exp(NEG_INF - m_finite) == 0 for masked entries.
            m_prev = m_sc[...]
            m_new = jnp.maximum(m_prev, jnp.max(s, axis=-1, keepdims=True))
            alpha = jnp.exp(m_prev - m_new)
            p = jnp.exp(s - m_new)                                          # f32
            l_sc[...] = alpha * l_sc[...] + jnp.sum(p, axis=-1, keepdims=True)
            acc_sc[...] = alpha * acc_sc[...] + jnp.einsum(
                'hqk,hkd->hqd', p.astype(v_ref.dtype), v_ref[0],
                preferred_element_type=jnp.float32)
            m_sc[...] = m_new

        # Tile classification (static tile sizes, traced grid ids).
        needed = ki * tk < (qi + 1) * tq            # not entirely above the diagonal
        unmasked = (ki + 1) * tk <= qi * tq + 1     # entirely at/below the diagonal

        @pl.when(unmasked)
        def _interior():
            step(apply_mask=False)

        @pl.when(jnp.logical_and(needed, jnp.logical_not(unmasked)))
        def _diagonal():
            step(apply_mask=True)

        @pl.when(ki == n_kv_tiles - 1)
        def _finalize():
            inv_l = pl.reciprocal(l_sc[...], approx=True)                   # EUP slot, ~free
            o_ref[0] = (acc_sc[...] * inv_l).astype(o_ref.dtype)

    return kernel


def flash_attention_pallas(q, k, v, *, tq, tk):
    """q/k/v: (B, H, T, D), scale already folded into q.  Returns (B, H, T, D) in q.dtype."""
    B, H, T, D = q.shape
    nq, nk = T // tq, T // tk

    def q_map(b, qi, ki):
        return (b, 0, qi, 0)

    def kv_map(b, qi, ki):
        # Clamp causally-skipped kv tiles onto the last useful one: same block index as the
        # previous step -> no DMA is issued for tiles the kernel would skip anyway.
        last_needed = ((qi + 1) * tq - 1) // tk
        return (b, 0, jnp.minimum(ki, last_needed), 0)

    return pl.pallas_call(
        _make_flash_kernel(tq, tk, nk),
        out_shape=jax.ShapeDtypeStruct((B, H, T, D), q.dtype),
        grid_spec=pltpu.PrefetchScalarGridSpec(
            num_scalar_prefetch=0,
            grid=(B, nq, nk),
            in_specs=[
                pl.BlockSpec((1, H, tq, D), q_map),
                pl.BlockSpec((1, H, tk, D), kv_map),
                pl.BlockSpec((1, H, tk, D), kv_map),
            ],
            out_specs=pl.BlockSpec((1, H, tq, D), q_map),
            scratch_shapes=[
                pltpu.VMEM((H, tq, 1), jnp.float32),   # running max m
                pltpu.VMEM((H, tq, 1), jnp.float32),   # running sum l
                pltpu.VMEM((H, tq, D), jnp.float32),   # running P@V accumulator
            ],
        ),
        compiler_params=pltpu.CompilerParams(
            # (B, q-tiles) parallel -> megacore split on v7x; kv axis carries the accumulators.
            dimension_semantics=("parallel", "parallel", "arbitrary"),
        ),
    )(q, k, v)


# ----------------------------------------------------------------------------------------
# Full SelfAttention.forward
# ----------------------------------------------------------------------------------------
def self_attention_pallas(x, w_qkv, b_qkv, w_proj, b_proj, n_heads,
                          *, tq=None, tk=None, matmul_dtype=jnp.bfloat16):
    """x: (B, T, C); w_qkv: (C, 3C); b_qkv: (3C,); w_proj: (C, C); b_proj: (C,)."""
    B, T, C = x.shape
    assert C % n_heads == 0
    D = C // n_heads
    # v6e/v7x MXUs are 256 wide -> default 256 tiles; 128 is already the fill floor on v5e.
    tq = min(T, 256) if tq is None else tq
    tk = min(T, 256) if tk is None else tk
    assert T % tq == 0 and T % tk == 0
    assert (tq == T or tq % 8 == 0) and (tk == T or tk % 8 == 0)

    # Fold 1/sqrt(D) into the Q slice of the fused QKV weights (one-time tiny host-side op).
    scale = 1.0 / math.sqrt(D)
    w_qkv = w_qkv.astype(jnp.float32).at[:, :C].multiply(scale)
    b_qkv = b_qkv.astype(jnp.float32).at[:C].multiply(scale)

    # 1) QKV projection hoisted out of the flash loop: one lane-dense (tt,C)x(C,3C) matmul.
    qkv = linear_pallas(x, w_qkv, b_qkv, out_dtype=matmul_dtype, tile=tq,
                        matmul_dtype=matmul_dtype)                       # (B, T, 3C) bf16

    # Head split: pure layout plumbing in XLA.
    q, k, v = jnp.split(qkv, 3, axis=-1)                                 # each (B, T, C)
    to_heads = lambda t: t.reshape(B, T, n_heads, D).transpose(0, 2, 1, 3)
    q, k, v = to_heads(q), to_heads(k), to_heads(v)                      # (B, H, T, D)

    # 2) Fused causal flash attention over the pre-projected Q/K/V.
    y = flash_attention_pallas(q, k, v, tq=tq, tk=tk)                    # (B, H, T, D) bf16

    # Head merge (layout plumbing) + 3) output projection: lane-dense (tt,C)x(C,C) matmul.
    y = y.transpose(0, 2, 1, 3).reshape(B, T, C)
    return linear_pallas(y, w_proj.astype(jnp.float32), b_proj.astype(jnp.float32),
                         out_dtype=x.dtype, tile=tq, matmul_dtype=matmul_dtype)


# ----------------------------------------------------------------------------------------
# Pure-JAX f32 reference mirroring the PyTorch forward
# ----------------------------------------------------------------------------------------
def self_attention_ref(x, w_qkv, b_qkv, w_proj, b_proj, n_heads):
    B, T, C = x.shape
    D = C // n_heads
    qkv = x @ w_qkv + b_qkv
    q, k, v = qkv[..., :C], qkv[..., C:2 * C], qkv[..., 2 * C:]
    q = q.reshape(B, T, n_heads, D).transpose(0, 2, 1, 3)
    k = k.reshape(B, T, n_heads, D).transpose(0, 2, 1, 3)
    v = v.reshape(B, T, n_heads, D).transpose(0, 2, 1, 3)
    att = jnp.einsum('bhqd,bhkd->bhqk', q, k) / math.sqrt(D)
    mask = jnp.tril(jnp.ones((T, T), dtype=bool))
    att = jnp.where(mask[None, None], att, -jnp.inf)
    att = jax.nn.softmax(att, axis=-1)
    y = jnp.einsum('bhqk,bhkd->bhqd', att, v)
    y = y.transpose(0, 2, 1, 3).reshape(B, T, C)
    return y @ w_proj + b_proj


if __name__ == "__main__":
    def run_case(B, T, C, n_heads, tq, tk):
        key = jax.random.PRNGKey(0)
        kx, kw1, kb1, kw2, kb2 = jax.random.split(key, 5)
        x = jax.random.normal(kx, (B, T, C), dtype=jnp.float32)
        bound = 1.0 / math.sqrt(C)   # nn.Linear-style init
        w_qkv = jax.random.uniform(kw1, (C, 3 * C), jnp.float32, -bound, bound)
        b_qkv = jax.random.uniform(kb1, (3 * C,), jnp.float32, -bound, bound)
        w_proj = jax.random.uniform(kw2, (C, C), jnp.float32, -bound, bound)
        b_proj = jax.random.uniform(kb2, (C,), jnp.float32, -bound, bound)

        out = self_attention_pallas(x, w_qkv, b_qkv, w_proj, b_proj, n_heads, tq=tq, tk=tk)
        out = jax.block_until_ready(out)
        ref = self_attention_ref(x, w_qkv, b_qkv, w_proj, b_proj, n_heads)
        assert out.shape == (B, T, C)
        err = float(jnp.max(jnp.abs(out - ref)))
        # bf16 matmul operands + approx reciprocal -> loose tolerance vs the f32 reference.
        assert jnp.allclose(out, ref, atol=5e-2, rtol=5e-2), f"mismatch (max abs err {err})"

    # Toy shape matching the module defaults: B=2, T=block_size=8, n_embd=32, 4 heads.
    run_case(2, 8, 32, 4, tq=8, tk=8)
    # Multi-tile case: exercises the online-softmax KV loop, causal tile skip and diag masking.
    run_case(2, 32, 32, 4, tq=8, tk=8)
    # Larger case: realistic head_dim=64, 128-wide tiles, interior + diagonal tiles per q-tile.
    run_case(2, 256, 256, 4, tq=128, tk=128)

    print("KERNEL_OK")
</pallas_src>

<mosaic_0001>
module attributes {stable_mosaic.version = 11 : i64} {
  func.func @_linear_kernel(%arg0: i32, %arg1: i32, %arg2: memref<1x8x32xf32, #tpu.memory_space<vmem>>, %arg3: memref<32x96xbf16, #tpu.memory_space<vmem>>, %arg4: memref<1x96xf32, #tpu.memory_space<vmem>>, %arg5: memref<1x8x96xbf16, #tpu.memory_space<vmem>>) attributes {dimension_semantics = [#tpu.dimension_semantics<parallel>, #tpu.dimension_semantics<parallel>], iteration_bounds = array<i64: 2, 1>, scalar_prefetch = 0 : i64, scratch_operands = 0 : i64, tpu.core_type = #tpu.core_type<tc>, window_params = [{transform_indices = @transform_0, window_bounds = array<i64: 1, 8, 32>}, {pipeline_mode = #tpu.pipeline_mode<synchronous>, transform_indices = @transform_1, window_bounds = array<i64: 32, 96>}, {pipeline_mode = #tpu.pipeline_mode<synchronous>, transform_indices = @transform_2, window_bounds = array<i64: 1, 96>}, {transform_indices = @transform_3, window_bounds = array<i64: 1, 8, 96>}]} {
    %c0 = arith.constant 0 : index
    %c0_0 = arith.constant 0 : index
    %c0_1 = arith.constant 0 : index
    %0 = vector.load %arg2[%c0, %c0_0, %c0_1] : memref<1x8x32xf32, #tpu.memory_space<vmem>>, vector<1x8x32xf32>
    %1 = vector.shape_cast %0 : vector<1x8x32xf32> to vector<8x32xf32>
    %2 = arith.truncf %1 : vector<8x32xf32> to vector<8x32xbf16>
    %c0_2 = arith.constant 0 : index
    %c0_3 = arith.constant 0 : index
    %3 = vector.load %arg3[%c0_2, %c0_3] : memref<32x96xbf16, #tpu.memory_space<vmem>>, vector<32x96xbf16>
    %cst = arith.constant dense<0.000000e+00> : vector<8x96xf32>
    %4 = tpu.matmul %2, %3, %cst {dimension_numbers = #tpu.dot_dimension_numbers<[1], [0], [0], [1], [0, 0, 1, 1], [], []>} : vector<8x32xbf16>, vector<32x96xbf16>, vector<8x96xf32> -> vector<8x96xf32>
    %c0_4 = arith.constant 0 : index
    %c0_5 = arith.constant 0 : index
    %5 = vector.load %arg4[%c0_4, %c0_5] : memref<1x96xf32, #tpu.memory_space<vmem>>, vector<1x96xf32>
    %6 = vector.broadcast %5 : vector<1x96xf32> to vector<8x96xf32>
    %7 = arith.addf %4, %6 : vector<8x96xf32>
    %8 = arith.truncf %7 : vector<8x96xf32> to vector<8x96xbf16>
    %c0_6 = arith.constant 0 : index
    %c0_7 = arith.constant 0 : index
    %c0_8 = arith.constant 0 : index
    %9 = vector.load %arg5[%c0_6, %c0_7, %c0_8] : memref<1x8x96xbf16, #tpu.memory_space<vmem>>, vector<1x8x96xbf16>
    %10 = vector.shape_cast %9 : vector<1x8x96xbf16> to vector<8x96xbf16>
    %11 = vector.shape_cast %8 : vector<8x96xbf16> to vector<1x8x96xbf16>
    tpu.vector_store %arg5[%c0_6, %c0_7, %c0_8], %11 {strides = array<i32>} : memref<1x8x96xbf16, #tpu.memory_space<vmem>>, vector<1x8x96xbf16>,
    return
  }
  func.func @transform_0(%arg0: i32, %arg1: i32) -> (i32, i32, i32) {
    %c0_i32 = arith.constant 0 : i32
    %c0_i32_0 = arith.constant 0 : i32
    return %arg0, %arg1, %c0_i32 : i32, i32, i32
  }
  func.func @transform_1(%arg0: i32, %arg1: i32) -> (i32, i32) {
    %c0_i32 = arith.constant 0 : i32
    %c0_i32_0 = arith.constant 0 : i32
    %c0_i32_1 = arith.constant 0 : i32
    return %c0_i32, %c0_i32_0 : i32, i32
  }
  func.func @transform_2(%arg0: i32, %arg1: i32) -> (i32, i32) {
    %c0_i32 = arith.constant 0 : i32
    %c0_i32_0 = arith.constant 0 : i32
    %c0_i32_1 = arith.constant 0 : i32
    return %c0_i32, %c0_i32_0 : i32, i32
  }
  func.func @transform_3(%arg0: i32, %arg1: i32) -> (i32, i32, i32) {
    %c0_i32 = arith.constant 0 : i32
    %c0_i32_0 = arith.constant 0 : i32
    return %arg0, %arg1, %c0_i32 : i32, i32, i32
  }
}

</mosaic_0001>

<llo_original>
// kernel: tpu_custom_call.1
$region0: #{tpu_custom_call.1}
  #allocation0 [shape = 'u32[]', space=smem, size = 0x4, offset = 0x4, fixed_abs, tag = 'smem constant byte address 0x4 - core index']
  #allocation1 [shape = 'u32[144,128]{1,0:T(1,128)}', space=vmem, size = 0x12000, scoped, tag = 'internal scratch']
  %s0 = inlined_call_operand.hbm [shape: f32[2,8,32], index: 0, kind: input, shape index: {}]
  %s1 = inlined_call_operand.hbm [shape: bf16[32,96], index: 1, kind: input, shape index: {}]
  %s2 = inlined_call_operand.vmem [shape: f32[1,96], index: 2, kind: input, shape index: {}]
  %s3 = inlined_call_operand.hbm [shape: bf16[2,8,96], index: 3, kind: output, shape index: {}]
  %s4 = sld [smem:[#allocation0]]
  $region53: #{tpu_custom_call.1} parent=0
    _
  %s6 = ssub.s32 1, %s4
  %s7 = scalar_select 0, %s6, %s4
  $region1: #{tpu_custom_call.1} parent=0
    #allocation2 [shape = 'u8[8192]{0}', space=vmem, size = 0x2000, scoped, tag = 'input window, operand 0']
    #allocation3 [shape = 's32[2]{0}', space=sflag, size = 0x8, scoped, tag = 'scoped memory for tpu_custom_call.1']
    #allocation4 [shape = 's32[2]{0}', space=sflag, size = 0x8, scoped, tag = 'scoped memory for tpu_custom_call.1']
    #allocation5 [shape = 'u8[8192]{0}', space=vmem, size = 0x2000, scoped, tag = 'input window, operand 1, single buffered']
    #allocation6 [shape = 's32[1]{0}', space=sflag, size = 0x4, scoped, tag = 'scoped memory for tpu_custom_call.1']
    #allocation7 [shape = 'u8[4096]{0}', space=vmem, size = 0x1000, scoped, tag = 'output window, operand 0']
    %8 = vsyncpa [#allocation3], 0
    %s9 = scalar_lea.sflag [#allocation3], 1
    %10 = vsyncpa %s9, 0
    %11 = vsyncpa [#allocation6], 0
    %12 = vsyncpa [#allocation4], 0
    %s13 = scalar_lea.sflag [#allocation4], 1
    %14 = vsyncpa %s13, 0
    loop: start=0, step=1, limit=4
    $region2: #{tpu_custom_call.1} parent=1 // loop_pre_header
      _
    $region3: #{tpu_custom_call.1} parent=1 // loop_header
      %s16 = sphi 0, %s20
      %p17 = scmp.ge.s32.totalorder %s16, 4
      %s23 = sphi 0, %s35
      %s24 = sphi 0, %s31
      %s25 = sphi 0, %s23
      %s26 = sphi 0, %s24
      %s27 = sphi 0, %s25
      %s28 = sphi 0, %s26
      %s40 = sphi 0, %s42
      %s43 = sphi 0, %s40
      %s44 = sphi 0, %s43
      %s60 = sphi 0, %s44
      %s64 = sphi 0, %s64
      %s66 = sphi 0, %s64
      %s67 = sphi 0, %s66
      %s81 = sphi 0, %s67
      %s85 = sphi 0, %s85
      %s87 = sphi 0, %s85
      %s88 = sphi 0, %s87
      %s102 = sphi 0, %s88
      %s110 = sphi 0, %s112
      %s113 = sphi 0, %s110
      %s114 = sphi 0, %s113
      %s130 = sphi 0, %s114
    $region4: #{tpu_custom_call.1} parent=1 // loop_header_branch
      %19 = sbr.rel (%p17) target = $region8
    $region5: #{tpu_custom_call.1} parent=1 // loop_body
      %s21 = ssub.s32 %s16, 1
      %s22 = ssub.s32 %s16, 2
      %s29 = sadd.s32 1, %s24
      %p30 = scmp.ge.s32.totalorder %s29, 1
      %s31 = scalar_select %p30, 0, %s29
      %s32 = sadd.s32 1, %s23
      %s33 = scalar_select %p30, %s32, %s23
      %p34 = scmp.ge.s32.totalorder %s33, 2
      %s35 = scalar_select %p34, 0, %s33
      %s36 = ssub.s32 %s23, %s35
      %s37 = ssub.s32 %s24, %s31
      %s38 = sor.u32 %s36, %s37
      %p39 = scmp.eq.s32.totalorder %s38, 0
      %s41 = sadd.s32 %s40, 1
      %s42 = scalar_select %p39, %s40, %s41
      %p45 = pneg %p39
      %p46 = scmp.eq.s32.totalorder %s16, 1
      %p47 = por %p45, %p46
      %p48 = scmp.ne.s32.totalorder %s40, %s43
      %p49 = scmp.eq.s32.totalorder %s16, 0
      %p50 = por %p48, %p49
      %p51 = scmp.ne.s32.totalorder %s40, %s43
      %p52 = scmp.eq.s32.totalorder %s21, 1
      %p53 = por %p51, %p52
      %p54 = scmp.ne.s32.totalorder %s43, %s44
      %p55 = scmp.eq.s32.totalorder %s21, 0
      %p56 = por %p54, %p55
      %p57 = scmp.ne.s32.totalorder %s43, %s44
      %p58 = scmp.eq.s32.totalorder %s22, 1
      %p59 = por %p57, %p58
      %p61 = scmp.ne.s32.totalorder %s44, %s60
      %p62 = scmp.eq.s32.totalorder %s22, 0
      %p63 = por %p61, %p62
      %s65 = sadd.s32 %s64, 1
      %p68 = scmp.eq.s32.totalorder %s16, 1
      %p69 = scmp.ne.s32.totalorder %s64, %s66
      %p70 = scmp.eq.s32.totalorder %s16, 0
      %p71 = por %p69, %p70
      %p72 = scmp.ne.s32.totalorder %s64, %s66
      %p73 = scmp.eq.s32.totalorder %s21, 1
      %p74 = por %p72, %p73
      %p75 = scmp.ne.s32.totalorder %s66, %s67
      %p76 = scmp.eq.s32.totalorder %s21, 0
      %p77 = por %p75, %p76
      %p78 = scmp.ne.s32.totalorder %s66, %s67
      %p79 = scmp.eq.s32.totalorder %s22, 1
      %p80 = por %p78, %p79
      %p82 = scmp.ne.s32.totalorder %s67, %s81
      %p83 = scmp.eq.s32.totalorder %s22, 0
      %p84 = por %p82, %p83
      %s86 = sadd.s32 %s85, 1
      %p89 = scmp.eq.s32.totalorder %s16, 1
      %p90 = scmp.ne.s32.totalorder %s85, %s87
      %p91 = scmp.eq.s32.totalorder %s16, 0
      %p92 = por %p90, %p91
      %p93 = scmp.ne.s32.totalorder %s85, %s87
      %p94 = scmp.eq.s32.totalorder %s21, 1
      %p95 = por %p93, %p94
      %p96 = scmp.ne.s32.totalorder %s87, %s88
      %p97 = scmp.eq.s32.totalorder %s21, 0
      %p98 = por %p96, %p97
      %p99 = scmp.ne.s32.totalorder %s87, %s88
      %p100 = scmp.eq.s32.totalorder %s22, 1
      %p101 = por %p99, %p100
      %p103 = scmp.ne.s32.totalorder %s88, %s102
      %p104 = scmp.eq.s32.totalorder %s22, 0
      %p105 = por %p103, %p104
      %s106 = ssub.s32 %s23, %s35
      %s107 = ssub.s32 %s24, %s31
      %s108 = sor.u32 %s106, %s107
      %p109 = scmp.eq.s32.totalorder %s108, 0
      %s111 = sadd.s32 %s110, 1
      %s112 = scalar_select %p109, %s110, %s111
      %p115 = pneg %p109
      %p116 = scmp.eq.s32.totalorder %s16, 1
      %p117 = por %p115, %p116
      %p118 = scmp.ne.s32.totalorder %s110, %s113
      %p119 = scmp.eq.s32.totalorder %s16, 0
      %p120 = por %p118, %p119
      %p121 = scmp.ne.s32.totalorder %s110, %s113
      %p122 = scmp.eq.s32.totalorder %s21, 1
      %p123 = por %p121, %p122
      %p124 = scmp.ne.s32.totalorder %s113, %s114
      %p125 = scmp.eq.s32.totalorder %s21, 0
      %p126 = por %p124, %p125
      %p127 = scmp.ne.s32.totalorder %s113, %s114
      %p128 = scmp.eq.s32.totalorder %s22, 1
      %p129 = por %p127, %p128
      %p131 = scmp.ne.s32.totalorder %s114, %s130
      %p132 = scmp.eq.s32.totalorder %s22, 0
      %p133 = por %p131, %p132
      %p134 = scmp.le.s32.totalorder 1, %s16
      %p135 = scmp.lt.s32.totalorder %s16, 3
      %p136 = pnand %p134, %p135
      %p137 = pneg %p136
      // Predicated region
      $region9: #{tpu_custom_call.1} parent=5 // pred_check
        _
      $region10: #{tpu_custom_call.1} parent=5 // pred_check_branch
        %139 = sbr.rel (%p136) target = $region12
      $region11: #{tpu_custom_call.1} parent=5 // pred_region
        %s140 = ssub.s32 %s16, 1
        // Predicated region
        $region13: #{tpu_custom_call.1} parent=11 // pred_check
          %p141 = pneg %p77
        $region14: #{tpu_custom_call.1} parent=11 // pred_check_branch
          %143 = sbr.rel (%p141) target = $region16
        $region15: #{tpu_custom_call.1} parent=11 // pred_region
          %s145 = ssub.s32 256, 256
          %146 = vsyncadd [#allocation6], %s145
          %s147 = sshll.u32 [#allocation5], 4
          %s148 = int_to_ptr.vmem [resolvable:$true] %s147
          %153 = dma.hbm_to_vmem [thread:$0]  %s1, 256, %s148, [#allocation6], 64, 64, 4
        $region16: #{tpu_custom_call.1} parent=11 // pred_fallthru
          _
        // Predicated region
        $region17: #{tpu_custom_call.1} parent=11 // pred_check
          %p154 = pneg %p98
        $region18: #{tpu_custom_call.1} parent=11 // pred_check_branch
          %156 = sbr.rel (%p154) target = $region20
        $region19: #{tpu_custom_call.1} parent=11 // pred_region
          _
        $region20: #{tpu_custom_call.1} parent=11 // pred_fallthru
          _
      $region12: #{tpu_custom_call.1} parent=5 // pred_fallthru
        _
      %p157 = scmp.lt.s32.totalorder %s16, 2
      // Predicated region
      $region21: #{tpu_custom_call.1} parent=5 // pred_check
        %p158 = pneg %p157
      $region22: #{tpu_custom_call.1} parent=5 // pred_check_branch
        %160 = sbr.rel (%p158) target = $region24
      $region23: #{tpu_custom_call.1} parent=5 // pred_region
        // Predicated region
        $region25: #{tpu_custom_call.1} parent=23 // pred_check
          %p161 = pneg %p50
        $region26: #{tpu_custom_call.1} parent=23 // pred_check_branch
          %163 = sbr.rel (%p161) target = $region28
        $region27: #{tpu_custom_call.1} parent=23 // pred_region
          %s164 = sand.u32 %s40, 1
          %s165 = scalar_lea.sflag [#allocation3], %s164
          %s166 = sand.u32 %s40, 1
          %s167 = smul.addr %s166, 8
          %s168 = scalar_lea.vmem [#allocation2], %s167
          %s170 = ssub.s32 128, 128
          %171 = vsyncadd %s165, %s170
          %s172 = sadd.s32 %s24, %s23
          %s173 = smul.addr %s172, 128
          %s174 = scalar_lea.hbm %s0, %s173
          %s176 = sshll.u32 %s168, 4
          %s177 = int_to_ptr.vmem [resolvable:$true] %s176
          %179 = dma.hbm_to_vmem [thread:$0]  %s174, 128, %s177, %s165
        $region28: #{tpu_custom_call.1} parent=23 // pred_fallthru
          _
      $region24: #{tpu_custom_call.1} parent=5 // pred_fallthru
        _
      %p180 = scmp.le.s32.totalorder 1, %s16
      %p181 = scmp.lt.s32.totalorder %s16, 3
      %p182 = pnand %p180, %p181
      %p183 = pneg %p182
      // Predicated region
      $region29: #{tpu_custom_call.1} parent=5 // pred_check
        _
      $region30: #{tpu_custom_call.1} parent=5 // pred_check_branch
        %185 = sbr.rel (%p182) target = $region32
      $region31: #{tpu_custom_call.1} parent=5 // pred_region
        %s186 = ssub.s32 %s16, 1
        %s187 = sand.u32 %s43, 1
        %s188 = scalar_lea.sflag [#allocation3], %s187
        %s189 = sand.u32 %s43, 1
        %s190 = smul.addr %s189, 8
        %s191 = scalar_lea.vmem [#allocation2], %s190
        // Predicated region
        $region33: #{tpu_custom_call.1} parent=31 // pred_check
          %p192 = pneg %p56
        $region34: #{tpu_custom_call.1} parent=31 // pred_check_branch
          %194 = sbr.rel (%p192) target = $region36
        $region35: #{tpu_custom_call.1} parent=31 // pred_region
          %195 = dma.done %s188, 128
        $region36: #{tpu_custom_call.1} parent=31 // pred_fallthru
          _
        // Predicated region
        $region37: #{tpu_custom_call.1} parent=31 // pred_check
          %p196 = pneg %p77
        $region38: #{tpu_custom_call.1} parent=31 // pred_check_branch
          %198 = sbr.rel (%p196) target = $region40
        $region39: #{tpu_custom_call.1} parent=31 // pred_region
          %199 = dma.done [#allocation6], 256
        $region40: #{tpu_custom_call.1} parent=31 // pred_fallthru
          _
        %s200 = sand.u32 %s43, 1
        %s201 = scalar_lea.sflag [#allocation3], %s200
        %s202 = sand.u32 %s43, 1
        %s203 = smul.addr %s202, 8
        %s204 = scalar_lea.vmem [#allocation2], %s203
        %p205 = pneg %p56
        %p206 = pneg %p53
        %p207 = pneg %p77
        %p208 = pneg %p74
        %p209 = pneg %p98
        %p210 = pneg %p95
        %p211 = pneg %p126
        %p212 = pneg %p123
        %s213 = sand.u32 %s113, 1
        %s214 = scalar_lea.sflag [#allocation4], %s213
        %s215 = sand.u32 %s113, 1
        %s216 = smul.addr %s215, 4
        %s217 = scalar_lea.vmem [#allocation7], %s216
        %v219 = vld [vmem:[%s191] sm:$0xff]
        %v220 = vpack.c.bf16 %v219, %v219
        %v221 = vld [vmem:[#allocation5] sm:$0xf]
        %v222 = vld [vmem:[#allocation5 + $0x4] sm:$0xf]
        %v223 = vld [vmem:[#allocation5 + $0x8] sm:$0xf]
        %v224 = vld [vmem:[#allocation5 + $0xc] sm:$0xf]
        %v225 = vld [vmem:[%s2] sm:$0x1]
        %v227 = vlaneseq
        %v228 = vshrl.u32 %v227, 7
        %v229 = vsub.s32 0, %v228
        %v230 = vrot.slane %v225, %v229
        %v236 = vunpack.c.l.b16 %v221
        %v237 = vunpack.c.l.b16 %v222
        %v238 = vunpack.c.l.b16 %v223
        %v239 = vunpack.c.l.b16 %v224
        %v240 = vpack.c.b16 %v237, %v236
        %v241 = vpack.c.b16 %v239, %v238
        %vm244 = vcmask 261120
        %v246 = vsel %vm244, %v220, 0
        %248 = vmatprep.subr.bf16.mxu0 0
        %249 = vmatpush1.bf16.msra.mxu0 0
        %250 = vmatprep.subr.bf16.mxu0 0
        %251 = vmatpush1.bf16.msra.mxu0 0
        %252 = vmatprep.subr.bf16.mxu0 0
        %253 = vmatpush1.bf16.msra.mxu0 0
        %254 = vmatprep.subr.bf16.mxu0 0
        %255 = vmatpush1.bf16.msra.mxu0 0
        %256 = vmatprep.subr.bf16.mxu0 0
        %257 = vmatpush1.bf16.msra.mxu0 0
        %258 = vmatprep.subr.bf16.mxu0 0
        %259 = vmatpush1.bf16.msra.mxu0 0
        %260 = vmatprep.subr.bf16.mxu0 0
        %261 = vmatpush1.bf16.msra.mxu0 %v241
        %262 = vmatprep.subr.bf16.mxu0 0
        %263 = vmatpush1.bf16.msra.mxu0 %v240
        %264 = vmatprep.subr.bf16.mxu0 0
        %265 = vmatpush2.bf16.msra.mxu0 0
        %266 = vmatprep.subr.bf16.mxu0 0
        %267 = vmatpush2.bf16.msra.mxu0 0
        %268 = vmatprep.subr.bf16.mxu0 0
        %269 = vmatpush2.bf16.msra.mxu0 0
        %270 = vmatprep.subr.bf16.mxu0 0
        %271 = vmatpush2.bf16.msra.mxu0 0
        %272 = vmatprep.subr.bf16.mxu0 0
        %273 = vmatpush2.bf16.msra.mxu0 0
        %274 = vmatprep.subr.bf16.mxu0 0
        %275 = vmatpush2.bf16.msra.mxu0 0
        %276 = vmatprep.subr.bf16.mxu0 0
        %277 = vmatpush2.bf16.msra.mxu0 0
        %278 = vmatprep.subr.bf16.mxu0 0
        %279 = vmatpush2.bf16.msra.mxu0 0
        %280 = vmatprep.mubr.bf16.mxu0 0
        %281 = vmatmul.mubr.bf16.gmra.mxu0 %v246
        %v282 = vpop.f32.mrf.mxu0
        %v283 = vadd.f32 %v230, %v282
        %v284 = vpop.f32.mrf.mxu0
        %v285 = vpop.f32.mrf.mxu0
        %v286 = vpop.f32.mrf.mxu0
        %287 = vdwg.mxu0
        %v288 = vpack.c.bf16 %v283, %v283
        %vm289 = vcmask 781312
        %290 = vst.msk [vmem:[%s217] sm:$0xf] %vm289, %v288
        %s291 = sand.u32 %s113, 1
        %s292 = scalar_lea.sflag [#allocation4], %s291
        %s293 = sand.u32 %s113, 1
        %s294 = smul.addr %s293, 4
        %s295 = scalar_lea.vmem [#allocation7], %s294
        // Predicated region
        $region41: #{tpu_custom_call.1} parent=31 // pred_check
          %p296 = pneg %p123
        $region42: #{tpu_custom_call.1} parent=31 // pred_check_branch
          %298 = sbr.rel (%p296) target = $region44
        $region43: #{tpu_custom_call.1} parent=31 // pred_region
          %s300 = ssub.s32 64, 64
          %301 = vsyncadd %s292, %s300
          %s302 = sadd.s32 %s26, %s25
          %s303 = smul.addr %s302, 64
          %s304 = scalar_lea.hbm %s3, %s303
          %s306 = sshll.u32 %s295, 4
          %s307 = int_to_ptr.vmem [resolvable:$true] %s306
          %309 = dma.vmem_to_hbm [thread:$0]  %s307, 64, %s304, %s292
        $region44: #{tpu_custom_call.1} parent=31 // pred_fallthru
          _
      $region32: #{tpu_custom_call.1} parent=5 // pred_fallthru
        _
      %p310 = scmp.le.s32.totalorder 2, %s16
      // Predicated region
      $region45: #{tpu_custom_call.1} parent=5 // pred_check
        %p311 = pneg %p310
      $region46: #{tpu_custom_call.1} parent=5 // pred_check_branch
        %313 = sbr.rel (%p311) target = $region48
      $region47: #{tpu_custom_call.1} parent=5 // pred_region
        %s314 = ssub.s32 %s16, 2
        // Predicated region
        $region49: #{tpu_custom_call.1} parent=47 // pred_check
          %p315 = pneg %p129
        $region50: #{tpu_custom_call.1} parent=47 // pred_check_branch
          %317 = sbr.rel (%p315) target = $region52
        $region51: #{tpu_custom_call.1} parent=47 // pred_region
          %s318 = sand.u32 %s114, 1
          %s319 = scalar_lea.sflag [#allocation4], %s318
          %s320 = sand.u32 %s114, 1
          %s321 = smul.addr %s320, 4
          %s322 = scalar_lea.vmem [#allocation7], %s321
          %323 = dma.done %s319, 64
        $region52: #{tpu_custom_call.1} parent=47 // pred_fallthru
          _
      $region48: #{tpu_custom_call.1} parent=5 // pred_fallthru
        _
    $region6: #{tpu_custom_call.1} parent=1 // loop_footer
      %s20 = sadd.s32 1, %s16
    $region7: #{tpu_custom_call.1} parent=1 // loop_footer_branch
      %15 = sbr.rel target = $region3
    $region8: #{tpu_custom_call.1} parent=1 // loop_exit
      _
    %324 = vsyncpa [#allocation3], 1
    %s325 = scalar_lea.sflag [#allocation3], 1
    %326 = vsyncpa %s325, 1
    %327 = vsyncpa [#allocation6], 1
    %328 = vsyncpa [#allocation4], 1
    %s329 = scalar_lea.sflag [#allocation4], 1
    %330 = vsyncpa %s329, 1

</llo_original>
